<compile_context>
chip_gen: v5e
topology: v5e:2x2
jax: 0.10.0
libtpu: 0.0.40
codegen_flags: <defaults>
</compile_context>

<pallas_src>
import functools
import numpy as np
import jax
import jax.numpy as jnp
from jax.experimental import pallas as pl
from jax.experimental.pallas import tpu as pltpu

_LANE = 128  # TPU lane width; matmul N / output columns are padded to this.


def _round_up(n, m):
    return (n + m - 1) // m * m


def _make_fused_factor_block_kernel(num_layers):
    """refs = (x, w_0 .. w_{L-1}, out); chained matmul + ReLU, h stays in vregs."""
    def kernel(*refs):
        x_ref = refs[0]
        w_refs = refs[1:1 + num_layers]
        o_ref = refs[1 + num_layers]
        h = x_ref[...]                                   # f32 (TILE_B, Din0)
        for w_ref in w_refs:
            # bf16 cast on the VPU, f32 accumulation on the MXU.
            acc = jnp.dot(h.astype(w_ref.dtype), w_ref[...],
                          preferred_element_type=jnp.float32)
            h = jnp.maximum(acc, 0.0)                    # ReLU on f32 accumulator
        o_ref[...] = h                                   # lane-dense (TILE_B, Npad) f32
    return kernel


def factor_block_forward(x, kernel_weights, out_channels_last,
                         out_features_last, *, tile_b=128):
    """FactorBlock.forward as one fused Pallas kernel.

    x:              (B, Cin, Din) float32
    kernel_weights: list of pre-flattened dense bf16 weights; layer l has shape
                    (rows_l, Npad_l) with Npad_l % 128 == 0, rows_0 = Cin*Din,
                    rows_l = Npad_{l-1}; real columns ordered (co, k).
    returns:        (B, Cout_last, K_last) float32, post-ReLU.
    """
    B = x.shape[0]
    num_layers = len(kernel_weights)
    din0 = x.shape[1] * x.shape[2]
    assert kernel_weights[0].shape[0] == din0
    n_last = kernel_weights[-1].shape[1]
    dout = out_channels_last * out_features_last
    assert dout <= n_last

    # f32 straight from HBM; in-kernel astype does the bf16 conversion.
    x_flat = x.reshape(B, din0)

    # Pad batch to a multiple of tile_b (no-op for the demo shapes).
    bp = _round_up(B, tile_b)
    if bp != B:
        x_flat = jnp.pad(x_flat, ((0, bp - B), (0, 0)))
    grid = (bp // tile_b,)

    # x / out: tiled over B (double-buffered by the default pipeline).
    # weights: full-array, grid-invariant blocks -> one resident VMEM copy,
    # no per-step re-DMA.  (Use pl.Buffered(1) / one packed slab if the weight
    # set ever grows to the MiB range.)
    in_specs = [pl.BlockSpec((tile_b, din0), lambda b: (b, 0))]
    in_specs += [pl.BlockSpec(w.shape, lambda b: (0, 0)) for w in kernel_weights]
    out_specs = pl.BlockSpec((tile_b, n_last), lambda b: (b, 0))

    # Explicit VMEM budget: 2 buffers each for the x / out tiles plus the
    # weight slabs (x2 for the default double buffer) with headroom, clamped
    # so it is safe on v7x's 64 MiB physical VMEM.
    tile_bytes = tile_b * din0 * 4 + tile_b * n_last * 4
    w_bytes = sum(int(np.prod(w.shape)) * w.dtype.itemsize for w in kernel_weights)
    vmem_limit = min(max(2 * (tile_bytes + w_bytes) + (4 << 20), 16 << 20), 32 << 20)

    out_flat = pl.pallas_call(
        _make_fused_factor_block_kernel(num_layers),
        out_shape=jax.ShapeDtypeStruct((bp, n_last), jnp.float32),
        grid=grid,
        in_specs=in_specs,
        out_specs=out_specs,
        compiler_params=pltpu.CompilerParams(
            dimension_semantics=("parallel",),   # B tiles independent -> v7x 2 TCs
            vmem_limit_bytes=vmem_limit),
    )(x_flat, *kernel_weights)

    # Drop batch / lane padding; columns are (co, k)-ordered so a plain
    # reshape recovers (B, Cout, K).
    return out_flat[:B, :dout].reshape(B, out_channels_last, out_features_last)


def init_factor_block(key, projections, in_features, in_channels,
                      out_channels_list, kernel_dtype=jnp.bfloat16):
    """Deterministic FactorBlock weights (bias=False, no batchnorm).

    Returns:
      kernel_weights: per-layer flat dense weights, rows ci*Din + d (padded to
        the previous layer's 128-multiple width), cols co*K + k zero-padded to
        a multiple of 128 — exactly the lane-dense layout the kernel consumes.
      ref_weights: per-layer structured f32 weights (K, Cout, Cin, Din) for
        the pure-JAX reference.
    """
    kernel_weights, ref_weights = [], []
    cin, din = in_channels, in_features
    rows = cin * din                     # layer-0 rows = real flattened input width
    layer_keys = jax.random.split(key, len(projections))
    for li, proj in enumerate(projections):
        cout = out_channels_list[li]
        K = len(proj)
        w_struct = np.zeros((K, cout, cin, din), np.float32)
        unit_keys = jax.random.split(layer_keys[li], K)
        for ui, (k, v) in enumerate(sorted(proj.items())):
            n = len(v)
            # Single kernel_size=3 / stride=2 conv collapses (n,1)->(1,1) only
            # for these factor sizes; larger factors would need >1 conv stage.
            assert n in (3, 4), (
                "dense single-conv modeling of TinyConv only valid for "
                "factor size 3 or 4, got %d" % n)
            bound = 1.0 / np.sqrt(cin * n)          # conv kernel (n,1): fan_in = cin*n
            wk = np.asarray(jax.random.uniform(
                unit_keys[ui], (cout, cin, n),
                minval=-bound, maxval=bound, dtype=jnp.float32))
            w_struct[k][:, :, np.asarray(v)] = wk
        ncols = cout * K
        npad = _round_up(ncols, _LANE)
        w_flat = np.zeros((rows, npad), np.float32)
        w_flat[:cin * din, :ncols] = np.transpose(
            w_struct, (2, 3, 1, 0)).reshape(cin * din, ncols)
        ref_weights.append(jnp.asarray(w_struct))
        kernel_weights.append(jnp.asarray(w_flat, dtype=kernel_dtype))
        cin, din = cout, K
        rows = npad                      # next layer's rows = this layer's padded cols
    return kernel_weights, ref_weights


def factor_block_reference(x, ref_weights):
    """Pure-JAX f32 reference of FactorBlock.forward (original layout)."""
    for w in ref_weights:                             # (K, Cout, Cin, Din)
        x = jax.nn.relu(jnp.einsum('bcd,kocd->bok', x, w))   # (B, Cout, K)
    return x


if __name__ == "__main__":
    key = jax.random.PRNGKey(0)

    # Batch >= 256 so the MXU rows actually fill; 128-row tiles over a
    # "parallel" grid axis (2 steps -> both v7x TensorCores busy).
    B, Cin, F0 = 256, 1, 16
    projections = [
        {0: [0, 1, 2, 3], 1: [4, 5, 6, 7], 2: [8, 9, 10, 11],
         3: [12, 13, 14, 15], 4: [0, 4, 8, 12], 5: [3, 7, 11, 15]},
        {0: [0, 1, 2], 1: [3, 4, 5], 2: [0, 2, 4], 3: [1, 3, 5]},
    ]
    out_channels = [4, 4]   # get_iter(out_channels, num_layers)

    kx, kw = jax.random.split(key)
    x = jax.random.normal(kx, (B, Cin, F0), dtype=jnp.float32)
    kernel_weights, ref_weights = init_factor_block(
        kw, projections, F0, Cin, out_channels)

    fwd = jax.jit(functools.partial(
        factor_block_forward,
        out_channels_last=out_channels[-1],
        out_features_last=len(projections[-1]),
        tile_b=128))

    out = jax.block_until_ready(fwd(x, kernel_weights))

    # Shape check: (B, out_channels[-1], out_features[-1])
    assert out.shape == (B, out_channels[-1], len(projections[-1])), out.shape

    ref = factor_block_reference(x, ref_weights)
    # bf16 weights/activations with f32 MXU accumulation => relaxed tolerance.
    np.testing.assert_allclose(np.asarray(out), np.asarray(ref),
                               rtol=2e-2, atol=2e-2)
    print("KERNEL_OK")
</pallas_src>

<mosaic_0001>
module attributes {stable_mosaic.version = 11 : i64} {
  func.func @kernel(%arg0: i32, %arg1: memref<128x16xf32, #tpu.memory_space<vmem>>, %arg2: memref<16x128xbf16, #tpu.memory_space<vmem>>, %arg3: memref<128x128xbf16, #tpu.memory_space<vmem>>, %arg4: memref<128x128xf32, #tpu.memory_space<vmem>>) attributes {dimension_semantics = [#tpu.dimension_semantics<parallel>], iteration_bounds = array<i64: 2>, scalar_prefetch = 0 : i64, scratch_operands = 0 : i64, tpu.core_type = #tpu.core_type<tc>, window_params = [{transform_indices = @transform_0, window_bounds = array<i64: 128, 16>}, {pipeline_mode = #tpu.pipeline_mode<synchronous>, transform_indices = @transform_1, window_bounds = array<i64: 16, 128>}, {pipeline_mode = #tpu.pipeline_mode<synchronous>, transform_indices = @transform_2, window_bounds = array<i64: 128, 128>}, {transform_indices = @transform_3, window_bounds = array<i64: 128, 128>}]} {
    %c0 = arith.constant 0 : index
    %c0_0 = arith.constant 0 : index
    %0 = vector.load %arg1[%c0, %c0_0] : memref<128x16xf32, #tpu.memory_space<vmem>>, vector<128x16xf32>
    %1 = arith.truncf %0 : vector<128x16xf32> to vector<128x16xbf16>
    %c0_1 = arith.constant 0 : index
    %c0_2 = arith.constant 0 : index
    %2 = vector.load %arg2[%c0_1, %c0_2] : memref<16x128xbf16, #tpu.memory_space<vmem>>, vector<16x128xbf16>
    %cst = arith.constant dense<0.000000e+00> : vector<128x128xf32>
    %3 = tpu.matmul %1, %2, %cst {dimension_numbers = #tpu.dot_dimension_numbers<[1], [0], [0], [1], [0, 0, 1, 1], [], []>} : vector<128x16xbf16>, vector<16x128xbf16>, vector<128x128xf32> -> vector<128x128xf32>
    %cst_3 = arith.constant 0.000000e+00 : f32
    %4 = vector.broadcast %cst_3 : f32 to vector<128x128xf32>
    %5 = arith.maximumf %3, %4 : vector<128x128xf32>
    %6 = arith.truncf %5 : vector<128x128xf32> to vector<128x128xbf16>
    %c0_4 = arith.constant 0 : index
    %c0_5 = arith.constant 0 : index
    %7 = vector.load %arg3[%c0_4, %c0_5] : memref<128x128xbf16, #tpu.memory_space<vmem>>, vector<128x128xbf16>
    %cst_6 = arith.constant dense<0.000000e+00> : vector<128x128xf32>
    %8 = tpu.matmul %6, %7, %cst_6 {dimension_numbers = #tpu.dot_dimension_numbers<[1], [0], [0], [1], [0, 0, 1, 1], [], []>} : vector<128x128xbf16>, vector<128x128xbf16>, vector<128x128xf32> -> vector<128x128xf32>
    %cst_7 = arith.constant 0.000000e+00 : f32
    %9 = vector.broadcast %cst_7 : f32 to vector<128x128xf32>
    %10 = arith.maximumf %8, %9 : vector<128x128xf32>
    %c0_8 = arith.constant 0 : index
    %c0_9 = arith.constant 0 : index
    %11 = vector.load %arg4[%c0_8, %c0_9] : memref<128x128xf32, #tpu.memory_space<vmem>>, vector<128x128xf32>
    tpu.vector_store %arg4[%c0_8, %c0_9], %10 {strides = array<i32>} : memref<128x128xf32, #tpu.memory_space<vmem>>, vector<128x128xf32>,
    return
  }
  func.func @transform_0(%arg0: i32) -> (i32, i32) {
    %c0_i32 = arith.constant 0 : i32
    %c0_i32_0 = arith.constant 0 : i32
    return %arg0, %c0_i32 : i32, i32
  }
  func.func @transform_1(%arg0: i32) -> (i32, i32) {
    %c0_i32 = arith.constant 0 : i32
    %c0_i32_0 = arith.constant 0 : i32
    %c0_i32_1 = arith.constant 0 : i32
    return %c0_i32, %c0_i32_0 : i32, i32
  }
  func.func @transform_2(%arg0: i32) -> (i32, i32) {
    %c0_i32 = arith.constant 0 : i32
    %c0_i32_0 = arith.constant 0 : i32
    %c0_i32_1 = arith.constant 0 : i32
    return %c0_i32, %c0_i32_0 : i32, i32
  }
  func.func @transform_3(%arg0: i32) -> (i32, i32) {
    %c0_i32 = arith.constant 0 : i32
    %c0_i32_0 = arith.constant 0 : i32
    return %arg0, %c0_i32 : i32, i32
  }
}

</mosaic_0001>

<llo_original>
// kernel: factor_block_forward.1
$region0: #{factor_block_forward.1}
  #allocation0 [shape = 'u32[]', space=smem, size = 0x4, offset = 0x4, fixed_abs, tag = 'smem constant byte address 0x4 - core index']
  #allocation1 [shape = 'u32[72,128]{1,0:T(1,128)}', space=vmem, size = 0x9000, scoped, tag = 'internal scratch']
  %s0 = inlined_call_operand.vmem [shape: f32[256,16], index: 0, kind: input, shape index: {}]
  %s1 = inlined_call_operand.vmem [shape: bf16[16,128], index: 1, kind: input, shape index: {}]
  %s2 = inlined_call_operand.vmem [shape: bf16[128,128], index: 2, kind: input, shape index: {}]
  %s3 = inlined_call_operand.vmem [shape: f32[256,128], index: 3, kind: output, shape index: {}]
  %s4 = sld [smem:[#allocation0]]
  $region45: #{factor_block_forward.1} parent=0
    _
  %s6 = ssub.s32 1, %s4
  %s7 = scalar_select 0, %s6, %s4
  loop: start=0, step=1, limit=4
  $region2: #{factor_block_forward.1} parent=0 // loop_pre_header
    _
  $region3: #{factor_block_forward.1} parent=0 // loop_header
    %s9 = sphi 0, %s13
    %p10 = scmp.ge.s32.totalorder %s9, 4
    %s19 = sphi 0, %s21
    %s22 = sphi 0, %s19
    %s23 = sphi 0, %s22
    %s39 = sphi 0, %s23
    %s43 = sphi 0, %s43
    %s45 = sphi 0, %s43
    %s46 = sphi 0, %s45
    %s60 = sphi 0, %s46
    %s64 = sphi 0, %s64
    %s66 = sphi 0, %s64
    %s67 = sphi 0, %s66
    %s81 = sphi 0, %s67
    %s87 = sphi 0, %s89
    %s90 = sphi 0, %s87
    %s91 = sphi 0, %s90
    %s107 = sphi 0, %s91
  $region4: #{factor_block_forward.1} parent=0 // loop_header_branch
    %12 = sbr.rel (%p10) target = $region8
  $region5: #{factor_block_forward.1} parent=0 // loop_body
    %s14 = ssub.s32 %s9, 1
    %s15 = ssub.s32 %s9, 2
    %s16 = sadd.s32 %s9, 1
    %s17 = ssub.s32 %s9, %s16
    %p18 = scmp.eq.s32.totalorder %s17, 0
    %s20 = sadd.s32 %s19, 1
    %s21 = scalar_select %p18, %s19, %s20
    %p24 = pneg %p18
    %p25 = scmp.eq.s32.totalorder %s9, 1
    %p26 = por %p24, %p25
    %p27 = scmp.ne.s32.totalorder %s19, %s22
    %p28 = scmp.eq.s32.totalorder %s9, 0
    %p29 = por %p27, %p28
    %p30 = scmp.ne.s32.totalorder %s19, %s22
    %p31 = scmp.eq.s32.totalorder %s14, 1
    %p32 = por %p30, %p31
    %p33 = scmp.ne.s32.totalorder %s22, %s23
    %p34 = scmp.eq.s32.totalorder %s14, 0
    %p35 = por %p33, %p34
    %p36 = scmp.ne.s32.totalorder %s22, %s23
    %p37 = scmp.eq.s32.totalorder %s15, 1
    %p38 = por %p36, %p37
    %p40 = scmp.ne.s32.totalorder %s23, %s39
    %p41 = scmp.eq.s32.totalorder %s15, 0
    %p42 = por %p40, %p41
    %s44 = sadd.s32 %s43, 1
    %p47 = scmp.eq.s32.totalorder %s9, 1
    %p48 = scmp.ne.s32.totalorder %s43, %s45
    %p49 = scmp.eq.s32.totalorder %s9, 0
    %p50 = por %p48, %p49
    %p51 = scmp.ne.s32.totalorder %s43, %s45
    %p52 = scmp.eq.s32.totalorder %s14, 1
    %p53 = por %p51, %p52
    %p54 = scmp.ne.s32.totalorder %s45, %s46
    %p55 = scmp.eq.s32.totalorder %s14, 0
    %p56 = por %p54, %p55
    %p57 = scmp.ne.s32.totalorder %s45, %s46
    %p58 = scmp.eq.s32.totalorder %s15, 1
    %p59 = por %p57, %p58
    %p61 = scmp.ne.s32.totalorder %s46, %s60
    %p62 = scmp.eq.s32.totalorder %s15, 0
    %p63 = por %p61, %p62
    %s65 = sadd.s32 %s64, 1
    %p68 = scmp.eq.s32.totalorder %s9, 1
    %p69 = scmp.ne.s32.totalorder %s64, %s66
    %p70 = scmp.eq.s32.totalorder %s9, 0
    %p71 = por %p69, %p70
    %p72 = scmp.ne.s32.totalorder %s64, %s66
    %p73 = scmp.eq.s32.totalorder %s14, 1
    %p74 = por %p72, %p73
    %p75 = scmp.ne.s32.totalorder %s66, %s67
    %p76 = scmp.eq.s32.totalorder %s14, 0
    %p77 = por %p75, %p76
    %p78 = scmp.ne.s32.totalorder %s66, %s67
    %p79 = scmp.eq.s32.totalorder %s15, 1
    %p80 = por %p78, %p79
    %p82 = scmp.ne.s32.totalorder %s67, %s81
    %p83 = scmp.eq.s32.totalorder %s15, 0
    %p84 = por %p82, %p83
    %s85 = ssub.s32 %s9, %s16
    %p86 = scmp.eq.s32.totalorder %s85, 0
    %s88 = sadd.s32 %s87, 1
    %s89 = scalar_select %p86, %s87, %s88
    %p92 = pneg %p86
    %p93 = scmp.eq.s32.totalorder %s9, 1
    %p94 = por %p92, %p93
    %p95 = scmp.ne.s32.totalorder %s87, %s90
    %p96 = scmp.eq.s32.totalorder %s9, 0
    %p97 = por %p95, %p96
    %p98 = scmp.ne.s32.totalorder %s87, %s90
    %p99 = scmp.eq.s32.totalorder %s14, 1
    %p100 = por %p98, %p99
    %p101 = scmp.ne.s32.totalorder %s90, %s91
    %p102 = scmp.eq.s32.totalorder %s14, 0
    %p103 = por %p101, %p102
    %p104 = scmp.ne.s32.totalorder %s90, %s91
    %p105 = scmp.eq.s32.totalorder %s15, 1
    %p106 = por %p104, %p105
    %p108 = scmp.ne.s32.totalorder %s91, %s107
    %p109 = scmp.eq.s32.totalorder %s15, 0
    %p110 = por %p108, %p109
    %p111 = scmp.le.s32.totalorder 1, %s9
    %p112 = scmp.lt.s32.totalorder %s9, 3
    %p113 = pnand %p111, %p112
    %p114 = pneg %p113
    // Predicated region
    $region9: #{factor_block_forward.1} parent=5 // pred_check
      _
    $region10: #{factor_block_forward.1} parent=5 // pred_check_branch
      %116 = sbr.rel (%p113) target = $region12
    $region11: #{factor_block_forward.1} parent=5 // pred_region
      %s117 = ssub.s32 %s9, 1
      // Predicated region
      $region13: #{factor_block_forward.1} parent=11 // pred_check
        %p118 = pneg %p56
      $region14: #{factor_block_forward.1} parent=11 // pred_check_branch
        %120 = sbr.rel (%p118) target = $region16
      $region15: #{factor_block_forward.1} parent=11 // pred_region
        _
      $region16: #{factor_block_forward.1} parent=11 // pred_fallthru
        _
      // Predicated region
      $region17: #{factor_block_forward.1} parent=11 // pred_check
        %p121 = pneg %p77
      $region18: #{factor_block_forward.1} parent=11 // pred_check_branch
        %123 = sbr.rel (%p121) target = $region20
      $region19: #{factor_block_forward.1} parent=11 // pred_region
        _
      $region20: #{factor_block_forward.1} parent=11 // pred_fallthru
        _
    $region12: #{factor_block_forward.1} parent=5 // pred_fallthru
      _
    %p124 = scmp.lt.s32.totalorder %s9, 2
    // Predicated region
    $region21: #{factor_block_forward.1} parent=5 // pred_check
      %p125 = pneg %p124
    $region22: #{factor_block_forward.1} parent=5 // pred_check_branch
      %127 = sbr.rel (%p125) target = $region24
    $region23: #{factor_block_forward.1} parent=5 // pred_region
      // Predicated region
      $region25: #{factor_block_forward.1} parent=23 // pred_check
        %p128 = pneg %p29
      $region26: #{factor_block_forward.1} parent=23 // pred_check_branch
        %130 = sbr.rel (%p128) target = $region28
      $region27: #{factor_block_forward.1} parent=23 // pred_region
        %s131 = smul.u32 16, %s9
        %p132 = scmp.lt.s32.totalorder %s131, 31
        %s133 = scalar_select %p132, %s131, 31
        %s134 = smul.addr %s133, 8
        %s135 = scalar_lea.vmem %s0, %s134
        %s136 = smul.u32 16, %s9
      $region28: #{factor_block_forward.1} parent=23 // pred_fallthru
        _
    $region24: #{factor_block_forward.1} parent=5 // pred_fallthru
      _
    %p137 = scmp.le.s32.totalorder 1, %s9
    %p138 = scmp.lt.s32.totalorder %s9, 3
    %p139 = pnand %p137, %p138
    %p140 = pneg %p139
    // Predicated region
    $region29: #{factor_block_forward.1} parent=5 // pred_check
      _
    $region30: #{factor_block_forward.1} parent=5 // pred_check_branch
      %142 = sbr.rel (%p139) target = $region32
    $region31: #{factor_block_forward.1} parent=5 // pred_region
      %s143 = ssub.s32 %s9, 1
      %s144 = smul.u32 16, %s14
      %p145 = scmp.lt.s32.totalorder %s144, 31
      %s146 = scalar_select %p145, %s144, 31
      %s147 = smul.addr %s146, 8
      %s148 = scalar_lea.vmem %s0, %s147
      %p149 = pneg %p35
      %p150 = pneg %p32
      %p151 = pneg %p56
      %p152 = pneg %p53
      %p153 = pneg %p77
      %p154 = pneg %p74
      %p155 = pneg %p103
      %p156 = pneg %p100
      %s157 = smul.u32 16, %s14
      %p158 = scmp.lt.s32.totalorder %s157, 31
      %s159 = scalar_select %p158, %s157, 31
      %s160 = smul.addr %s159, 8
      %s161 = scalar_lea.vmem %s3, %s160
      %s162 = smul.u32 16, %s14
      %p163 = scmp.lt.s32.totalorder %s162, 31
      %s164 = scalar_select %p163, %s162, 31
      %s165 = smul.addr %s164, 8
      %s166 = scalar_lea.vmem %s0, %s165
      %s167 = smul.u32 16, %s14
      %s168 = smul.u32 16, %s14
      %p169 = scmp.lt.s32.totalorder %s168, 31
      %s170 = scalar_select %p169, %s168, 31
      %s171 = smul.addr %s170, 8
      %s172 = scalar_lea.vmem %s3, %s171
      %s173 = smul.u32 16, %s14
      %v175 = vld [vmem:[%s166] sm:$0xff]
      %v176 = vld [vmem:[%s166 + $0x8] sm:$0xff]
      %v177 = vld [vmem:[%s166 + $0x10] sm:$0xff]
      %v178 = vld [vmem:[%s166 + $0x18] sm:$0xff]
      %v179 = vld [vmem:[%s166 + $0x20] sm:$0xff]
      %v180 = vld [vmem:[%s166 + $0x28] sm:$0xff]
      %v181 = vld [vmem:[%s166 + $0x30] sm:$0xff]
      %v182 = vld [vmem:[%s166 + $0x38] sm:$0xff]
      %v183 = vld [vmem:[%s166 + $0x40] sm:$0xff]
      %v184 = vld [vmem:[%s166 + $0x48] sm:$0xff]
      %v185 = vld [vmem:[%s166 + $0x50] sm:$0xff]
      %v186 = vld [vmem:[%s166 + $0x58] sm:$0xff]
      %v187 = vld [vmem:[%s166 + $0x60] sm:$0xff]
      %v188 = vld [vmem:[%s166 + $0x68] sm:$0xff]
      %v189 = vld [vmem:[%s166 + $0x70] sm:$0xff]
      %v190 = vld [vmem:[%s166 + $0x78] sm:$0xff]
      %v191 = vpack.c.bf16 %v176, %v175
      %v192 = vpack.c.bf16 %v178, %v177
      %v193 = vpack.c.bf16 %v180, %v179
      %v194 = vpack.c.bf16 %v182, %v181
      %v195 = vpack.c.bf16 %v184, %v183
      %v196 = vpack.c.bf16 %v186, %v185
      %v197 = vpack.c.bf16 %v188, %v187
      %v198 = vpack.c.bf16 %v190, %v189
      %v199 = vld [vmem:[%s1] sm:$0xf]
      %v200 = vld [vmem:[%s1 + $0x4] sm:$0xf]
      %v203 = vunpack.c.l.b16 %v199
      %v204 = vunpack.c.l.b16 %v200
      %v205 = vpack.c.b16 %v204, %v203
      %vm207 = vcmask 130048
      %v209 = vsel %vm207, %v191, 0
      %v212 = vsel %vm207, %v192, 0
      %v215 = vsel %vm207, %v193, 0
      %v218 = vsel %vm207, %v194, 0
      %v221 = vsel %vm207, %v195, 0
      %v224 = vsel %vm207, %v196, 0
      %v227 = vsel %vm207, %v197, 0
      %v230 = vsel %vm207, %v198, 0
      %232 = vmatpush.bf16.msra.mxu0 0
      %233 = vmatpush.bf16.msra.mxu0 0
      %234 = vmatpush.bf16.msra.mxu0 0
      %235 = vmatpush.bf16.msra.mxu0 0
      %236 = vmatpush.bf16.msra.mxu0 0
      %237 = vmatpush.bf16.msra.mxu0 0
      %238 = vmatpush.bf16.msra.mxu0 0
      %239 = vmatpush.bf16.msra.mxu0 %v205
      %240 = vmatmul.bf16.gmra.mxu0 %v209
      %v241 = vpop.f32.mrf.mxu0
      %v242 = vadd.f32 0.0, %v241
      %v243 = vpop.f32.mrf.mxu0
      %v244 = vadd.f32 0.0, %v243
      %245 = vmatmul.bf16.gmra.mxu0 %v212
      %v246 = vpop.f32.mrf.mxu0
      %v247 = vadd.f32 0.0, %v246
      %v248 = vpop.f32.mrf.mxu0
      %v249 = vadd.f32 0.0, %v248
      %250 = vmatmul.bf16.gmra.mxu0 %v215
      %v251 = vpop.f32.mrf.mxu0
      %v252 = vadd.f32 0.0, %v251
      %v253 = vpop.f32.mrf.mxu0
      %v254 = vadd.f32 0.0, %v253
      %255 = vmatmul.bf16.gmra.mxu0 %v218
      %v256 = vpop.f32.mrf.mxu0
      %v257 = vadd.f32 0.0, %v256
      %v258 = vpop.f32.mrf.mxu0
      %v259 = vadd.f32 0.0, %v258
      %260 = vmatmul.bf16.gmra.mxu0 %v221
      %v261 = vpop.f32.mrf.mxu0
      %v262 = vadd.f32 0.0, %v261
      %v263 = vpop.f32.mrf.mxu0
      %v264 = vadd.f32 0.0, %v263
      %265 = vmatmul.bf16.gmra.mxu0 %v224
      %v266 = vpop.f32.mrf.mxu0
      %v267 = vadd.f32 0.0, %v266
      %v268 = vpop.f32.mrf.mxu0
      %v269 = vadd.f32 0.0, %v268
      %270 = vmatmul.bf16.gmra.mxu0 %v227
      %v271 = vpop.f32.mrf.mxu0
      %v272 = vadd.f32 0.0, %v271
      %v273 = vpop.f32.mrf.mxu0
      %v274 = vadd.f32 0.0, %v273
      %275 = vmatmul.bf16.gmra.mxu0 %v230
      %v276 = vpop.f32.mrf.mxu0
      %v277 = vadd.f32 0.0, %v276
      %v278 = vpop.f32.mrf.mxu0
      %v279 = vadd.f32 0.0, %v278
      %280 = vdwg.mxu0
      %v281 = vmax.f32 %v242, 0.0
      %v282 = vmax.f32 %v244, 0.0
      %v283 = vmax.f32 %v247, 0.0
      %v284 = vmax.f32 %v249, 0.0
      %v285 = vmax.f32 %v252, 0.0
      %v286 = vmax.f32 %v254, 0.0
      %v287 = vmax.f32 %v257, 0.0
      %v288 = vmax.f32 %v259, 0.0
      %v289 = vmax.f32 %v262, 0.0
      %v290 = vmax.f32 %v264, 0.0
      %v291 = vmax.f32 %v267, 0.0
      %v292 = vmax.f32 %v269, 0.0
      %v293 = vmax.f32 %v272, 0.0
      %v294 = vmax.f32 %v274, 0.0
      %v295 = vmax.f32 %v277, 0.0
      %v296 = vmax.f32 %v279, 0.0
      %v297 = vpack.c.bf16 %v282, %v281
      %v298 = vpack.c.bf16 %v284, %v283
      %v299 = vpack.c.bf16 %v286, %v285
      %v300 = vpack.c.bf16 %v288, %v287
      %v301 = vpack.c.bf16 %v290, %v289
      %v302 = vpack.c.bf16 %v292, %v291
      %v303 = vpack.c.bf16 %v294, %v293
      %v304 = vpack.c.bf16 %v296, %v295
      %v305 = vld [vmem:[%s2] sm:$0xf]
      %v306 = vld [vmem:[%s2 + $0x4] sm:$0xf]
      %v307 = vld [vmem:[%s2 + $0x8] sm:$0xf]
      %v308 = vld [vmem:[%s2 + $0xc] sm:$0xf]
      %v309 = vld [vmem:[%s2 + $0x10] sm:$0xf]
      %v310 = vld [vmem:[%s2 + $0x14] sm:$0xf]
      %v311 = vld [vmem:[%s2 + $0x18] sm:$0xf]
      %v312 = vld [vmem:[%s2 + $0x1c] sm:$0xf]
      %v313 = vld [vmem:[%s2 + $0x20] sm:$0xf]
      %v314 = vld [vmem:[%s2 + $0x24] sm:$0xf]
      %v315 = vld [vmem:[%s2 + $0x28] sm:$0xf]
      %v316 = vld [vmem:[%s2 + $0x2c] sm:$0xf]
      %v317 = vld [vmem:[%s2 + $0x30] sm:$0xf]
      %v318 = vld [vmem:[%s2 + $0x34] sm:$0xf]
      %v319 = vld [vmem:[%s2 + $0x38] sm:$0xf]
      %v320 = vld [vmem:[%s2 + $0x3c] sm:$0xf]
      %v337 = vunpack.c.l.b16 %v305
      %v338 = vunpack.c.l.b16 %v306
      %v339 = vunpack.c.l.b16 %v307
      %v340 = vunpack.c.l.b16 %v308
      %v341 = vunpack.c.l.b16 %v309
      %v342 = vunpack.c.l.b16 %v310
      %v343 = vunpack.c.l.b16 %v311
      %v344 = vunpack.c.l.b16 %v312
      %v345 = vunpack.c.l.b16 %v313
      %v346 = vunpack.c.l.b16 %v314
      %v347 = vunpack.c.l.b16 %v315
      %v348 = vunpack.c.l.b16 %v316
      %v349 = vunpack.c.l.b16 %v317
      %v350 = vunpack.c.l.b16 %v318
      %v351 = vunpack.c.l.b16 %v319
      %v352 = vunpack.c.l.b16 %v320
      %v353 = vpack.c.b16 %v338, %v337
      %v354 = vpack.c.b16 %v340, %v339
      %v355 = vpack.c.b16 %v342, %v341
      %v356 = vpack.c.b16 %v344, %v343
      %v357 = vpack.c.b16 %v346, %v345
      %v358 = vpack.c.b16 %v348, %v347
      %v359 = vpack.c.b16 %v350, %v349
      %v360 = vpack.c.b16 %v352, %v351
      %369 = vmatpush.bf16.msra.mxu0 %v360
      %370 = vmatpush.bf16.msra.mxu0 %v359
      %371 = vmatpush.bf16.msra.mxu0 %v358
      %372 = vmatpush.bf16.msra.mxu0 %v357
      %373 = vmatpush.bf16.msra.mxu0 %v356
      %374 = vmatpush.bf16.msra.mxu0 %v355
      %375 = vmatpush.bf16.msra.mxu0 %v354
      %376 = vmatpush.bf16.msra.mxu0 %v353
      %377 = vmatmul.bf16.gmra.mxu0 %v297
      %v378 = vpop.f32.mrf.mxu0
      %v379 = vadd.f32 0.0, %v378
      %v380 = vpop.f32.mrf.mxu0
      %v381 = vadd.f32 0.0, %v380
      %382 = vmatmul.bf16.gmra.mxu0 %v298
      %v383 = vpop.f32.mrf.mxu0
      %v384 = vadd.f32 0.0, %v383
      %v385 = vpop.f32.mrf.mxu0
      %v386 = vadd.f32 0.0, %v385
      %387 = vmatmul.bf16.gmra.mxu0 %v299
      %v388 = vpop.f32.mrf.mxu0
      %v389 = vadd.f32 0.0, %v388
      %v390 = vpop.f32.mrf.mxu0
      %v391 = vadd.f32 0.0, %v390
      %392 = vmatmul.bf16.gmra.mxu0 %v300
      %v393 = vpop.f32.mrf.mxu0
      %v394 = vadd.f32 0.0, %v393
      %v395 = vpop.f32.mrf.mxu0
      %v396 = vadd.f32 0.0, %v395
      %397 = vmatmul.bf16.gmra.mxu0 %v301
      %v398 = vpop.f32.mrf.mxu0
      %v399 = vadd.f32 0.0, %v398
      %v400 = vpop.f32.mrf.mxu0
      %v401 = vadd.f32 0.0, %v400
      %402 = vmatmul.bf16.gmra.mxu0 %v302
      %v403 = vpop.f32.mrf.mxu0
      %v404 = vadd.f32 0.0, %v403
      %v405 = vpop.f32.mrf.mxu0
      %v406 = vadd.f32 0.0, %v405
      %407 = vmatmul.bf16.gmra.mxu0 %v303
      %v408 = vpop.f32.mrf.mxu0
      %v409 = vadd.f32 0.0, %v408
      %v410 = vpop.f32.mrf.mxu0
      %v411 = vadd.f32 0.0, %v410
      %412 = vmatmul.bf16.gmra.mxu0 %v304
      %v413 = vpop.f32.mrf.mxu0
      %v414 = vadd.f32 0.0, %v413
      %v415 = vpop.f32.mrf.mxu0
      %v416 = vadd.f32 0.0, %v415
      %417 = vdwg.mxu0
      %v418 = vmax.f32 %v379, 0.0
      %v419 = vmax.f32 %v381, 0.0
      %v420 = vmax.f32 %v384, 0.0
      %v421 = vmax.f32 %v386, 0.0
      %v422 = vmax.f32 %v389, 0.0
      %v423 = vmax.f32 %v391, 0.0
      %v424 = vmax.f32 %v394, 0.0
      %v425 = vmax.f32 %v396, 0.0
      %v426 = vmax.f32 %v399, 0.0
      %v427 = vmax.f32 %v401, 0.0
      %v428 = vmax.f32 %v404, 0.0
      %v429 = vmax.f32 %v406, 0.0
      %v430 = vmax.f32 %v409, 0.0
      %v431 = vmax.f32 %v411, 0.0
      %v432 = vmax.f32 %v414, 0.0
      %v433 = vmax.f32 %v416, 0.0
      %434 = vst [vmem:[%s172] sm:$0xff] %v418
      %435 = vst [vmem:[%s172 + $0x8] sm:$0xff] %v419
      %436 = vst [vmem:[%s172 + $0x10] sm:$0xff] %v420
      %437 = vst [vmem:[%s172 + $0x18] sm:$0xff] %v421
      %438 = vst [vmem:[%s172 + $0x20] sm:$0xff] %v422
      %439 = vst [vmem:[%s172 + $0x28] sm:$0xff] %v423
      %440 = vst [vmem:[%s172 + $0x30] sm:$0xff] %v424
      %441 = vst [vmem:[%s172 + $0x38] sm:$0xff] %v425
      %442 = vst [vmem:[%s172 + $0x40] sm:$0xff] %v426
      %443 = vst [vmem:[%s172 + $0x48] sm:$0xff] %v427
      %444 = vst [vmem:[%s172 + $0x50] sm:$0xff] %v428
      %445 = vst [vmem:[%s172 + $0x58] sm:$0xff] %v429
      %446 = vst [vmem:[%s172 + $0x60] sm:$0xff] %v430
      %447 = vst [vmem:[%s172 + $0x68] sm:$0xff] %v431
      %448 = vst [vmem:[%s172 + $0x70] sm:$0xff] %v432
      %449 = vst [vmem:[%s172 + $0x78] sm:$0xff] %v433
      %s450 = smul.u32 16, %s14
      %p451 = scmp.lt.s32.totalorder %s450, 31
      %s452 = scalar_select %p451, %s450, 31
      %s453 = smul.addr %s452, 8
      %s454 = scalar_lea.vmem %s3, %s453
      // Predicated region
      $region33: #{factor_block_forward.1} parent=31 // pred_check
        %p455 = pneg %p100
      $region34: #{factor_block_forward.1} parent=31 // pred_check_branch
        %457 = sbr.rel (%p455) target = $region36
      $region35: #{factor_block_forward.1} parent=31 // pred_region
        %s458 = smul.u32 16, %s14
      $region36: #{factor_block_forward.1} parent=31 // pred_fallthru
        _
    $region32: #{factor_block_forward.1} parent=5 // pred_fallthru
      _
    %p459 = scmp.le.s32.totalorder 2, %s9
    // Predicated region
    $region37: #{factor_block_forward.1} parent=5 // pred_check
      %p460 = pneg %p459
    $region38: #{factor_block_forward.1} parent=5 // pred_check_branch
      %462 = sbr.rel (%p460) target = $region40
    $region39: #{factor_block_forward.1} parent=5 // pred_region
      %s463 = ssub.s32 %s9, 2
      // Predicated region
      $region41: #{factor_block_forward.1} parent=39 // pred_check
        %p464 = pneg %p106
      $region42: #{factor_block_forward.1} parent=39 // pred_check_branch
        %466 = sbr.rel (%p464) target = $region44
      $region43: #{factor_block_forward.1} parent=39 // pred_region
        %s467 = smul.u32 16, %s15
        %p468 = scmp.lt.s32.totalorder %s467, 31
        %s469 = scalar_select %p468, %s467, 31
        %s470 = smul.addr %s469, 8
        %s471 = scalar_lea.vmem %s3, %s470
      $region44: #{factor_block_forward.1} parent=39 // pred_fallthru
        _
    $region40: #{factor_block_forward.1} parent=5 // pred_fallthru
      _
  $region6: #{factor_block_forward.1} parent=0 // loop_footer
    %s13 = sadd.s32 1, %s9
  $region7: #{factor_block_forward.1} parent=0 // loop_footer_branch
    %8 = sbr.rel target = $region3
  $region8: #{factor_block_forward.1} parent=0 // loop_exit
    _

</llo_original>
